<compile_context>
chip_gen: v7x
topology: tpu7x:2x2x1
jax: 0.10.0
libtpu: 0.0.40
codegen_flags: <defaults>
</compile_context>

<pallas_src>
import functools

import jax
import jax.numpy as jnp
from jax import lax
from jax.experimental import pallas as pl
from jax.experimental.pallas import tpu as pltpu


_LANES = 128                      # lane-dense store width
_VMEM_LIMIT = 48 * 1024 * 1024    # safe on v7x's 64 MiB physical VMEM; ample for these tiles


# ---------------------------------------------------------------------------
# Shared in-kernel helpers
# ---------------------------------------------------------------------------
def _accumulate_moments(mean_ref, m2_ref, tile, n_prev_rows):
    """Chan parallel-variance combine of a (TM, C) tile into resident (1, 1, C) accumulators."""
    nb = jnp.float32(tile.shape[0])
    na = (n_prev_rows).astype(jnp.float32)
    tot = na + nb
    tmean2d = jnp.mean(tile, axis=0, keepdims=True)              # (1, C)
    tm2_2d = jnp.sum((tile - tmean2d) ** 2, axis=0, keepdims=True)
    tmean = tmean2d[None]                                        # (1, 1, C)
    tm2 = tm2_2d[None]
    delta = tmean - mean_ref[...]
    mean_ref[...] += delta * (nb / tot)
    m2_ref[...] += tm2 + delta * delta * (na * nb / tot)


def _extract_qkv(s, out_channels, branch_stride, *, need_v):
    """Extract q, k (and optionally v) from the packed sigmoid slab s: (TM, CW).

    Branch i occupies lanes [i*branch_stride, i*branch_stride + out_channels).  Extraction is a
    lane roll (XLU) + a first-Cout-lane mask, so every branch lands on lanes [0, Cout) with
    exact zeros elsewhere (keeps the Tanimoto complement expansion with the real channel count
    correct).
    """
    cw = s.shape[1]
    lane = lax.broadcasted_iota(jnp.int32, (1, cw), 1)
    bmask = (lane < out_channels).astype(jnp.float32)
    q = s * bmask
    k = pltpu.roll(s, shift=cw - branch_stride, axis=1) * bmask
    if not need_v:
        return q, k, None
    v = pltpu.roll(s, shift=cw - 2 * branch_stride, axis=1) * bmask
    return q, k, v


def _attention_rows(y, scale, shift, att_ch, *, out_channels, branch_stride, smooth):
    """Fused BN-fold + sigmoid + spatial Tanimoto + attention combine for one row tile."""
    z = y * scale + shift                                 # folded BN: one multiply-add
    s = 1.0 / (1.0 + jnp.exp(-z))                         # sigmoid (EUP exp)
    q, k, v = _extract_qkv(s, out_channels, branch_stride, need_v=True)

    # Spatial Tanimoto similarity (reduce over channels, per pixel).  The complement term uses
    # the exact algebraic expansion with the REAL channel count; padded lanes are exact zeros.
    tpl = jnp.sum(q * k, axis=1, keepdims=True)
    sq = jnp.sum(q * q + k * k, axis=1, keepdims=True)
    sum_q = jnp.sum(q, axis=1, keepdims=True)
    sum_k = jnp.sum(k, axis=1, keepdims=True)
    c = jnp.float32(out_channels)
    score = (tpl + smooth) / (sq - tpl + smooth)
    tpl_c = c - sum_q - sum_k + tpl
    sq_c = 2.0 * c - 2.0 * sum_q - 2.0 * sum_k + sq
    score_c = (tpl_c + smooth) / (sq_c - tpl_c + smooth)
    att_spatial = 0.5 * (score + score_c)                 # (TM, 1)

    return 0.5 * v * (att_spatial + att_ch)               # (TM, CW), nonzero in lanes [0, Cout)


# ---------------------------------------------------------------------------
# Kernel A: fused q|k|v convolution (single im2col matmul) + per-image conv-BN moments.
# ---------------------------------------------------------------------------
def _conv_stats_kernel(xcol_ref, w_ref, y_ref, mean_ref, m2_ref, *, row_tile):
    t = pl.program_id(1)

    @pl.when(t == 0)
    def _():
        mean_ref[...] = jnp.zeros_like(mean_ref)
        m2_ref[...] = jnp.zeros_like(m2_ref)

    # One MXU matmul: (TM, K*K*Cin) @ (K*K*Cin, CW) -> lane-dense slab.
    y = jnp.dot(xcol_ref[...], w_ref[...], preferred_element_type=jnp.float32)
    y_ref[...] = y
    _accumulate_moments(mean_ref, m2_ref, y, t * row_tile)


# ---------------------------------------------------------------------------
# Kernel B: q,k = sigmoid(scale*y+shift); per-image channel-similarity sums.
# ---------------------------------------------------------------------------
def _qkv_channel_sim_kernel(y_ref, scale_ref, shift_ref, csum_ref,
                            *, out_channels, branch_stride):
    t = pl.program_id(1)
    z = y_ref[...] * scale_ref[...] + shift_ref[...]
    s = 1.0 / (1.0 + jnp.exp(-z))
    q, k, _ = _extract_qkv(s, out_channels, branch_stride, need_v=False)

    p_qk = jnp.sum(q * k, axis=0, keepdims=True)
    p_q2k2 = jnp.sum(q * q + k * k, axis=0, keepdims=True)
    p_q = jnp.sum(q, axis=0, keepdims=True)
    p_k = jnp.sum(k, axis=0, keepdims=True)
    partial = jnp.concatenate([p_qk, p_q2k2, p_q, p_k], axis=0)[None]   # (1, 4, CW)

    @pl.when(t == 0)
    def _():
        csum_ref[...] = jnp.zeros_like(csum_ref)

    csum_ref[...] += partial


# ---------------------------------------------------------------------------
# Kernel C: attention rows (written out) + per-image moments for the final BatchNorm.
# ---------------------------------------------------------------------------
def _attention_stats_kernel(y_ref, scale_ref, shift_ref, attch_ref,
                            att_ref, fmean_ref, fm2_ref,
                            *, row_tile, out_channels, branch_stride, smooth):
    t = pl.program_id(1)

    @pl.when(t == 0)
    def _():
        fmean_ref[...] = jnp.zeros_like(fmean_ref)
        fm2_ref[...] = jnp.zeros_like(fm2_ref)

    att = _attention_rows(y_ref[...], scale_ref[...], shift_ref[...], attch_ref[...],
                          out_channels=out_channels, branch_stride=branch_stride,
                          smooth=smooth)
    att_ref[...] = att
    _accumulate_moments(fmean_ref, fm2_ref, att, t * row_tile)


# ---------------------------------------------------------------------------
# Kernel D: trivial final-BN scale/shift map over the attention slab.
# ---------------------------------------------------------------------------
def _final_norm_kernel(att_ref, fscale_ref, fshift_ref, out_ref):
    out_ref[...] = (att_ref[...] * fscale_ref[...] + fshift_ref[...]).astype(out_ref.dtype)


# ---------------------------------------------------------------------------
# Wrapper-side helpers
# ---------------------------------------------------------------------------
def _merge_group_moments(means, m2s, rows_per_group):
    """Combine per-image (mean, M2) rows (N, 1, C) with equal group sizes into totals (1, C)."""
    mean_t = jnp.mean(means, axis=0)                                        # (1, C)
    m2_t = jnp.sum(m2s, axis=0) + rows_per_group * jnp.sum(
        (means - mean_t[None]) ** 2, axis=0)                                # (1, C)
    return mean_t, m2_t


def fractal_attention(x_nchw, params, *, kernel_size=3, padding=1,
                      eps=1e-5, smooth=1e-5, row_tile=None):
    """FractalAttention forward.  x_nchw: (N, Cin, H, W).  params: dict of branch weights."""
    wq, gq, bq = params["query"]
    wk, gk, bk = params["key"]
    wv, gv, bv = params["value"]
    g2, b2 = params["norm"]

    N, Cin, H, W = x_nchw.shape
    Cout = wq.shape[0]
    K = kernel_size
    assert Cout <= _LANES, "TODO(synk): out_channels > 128 needs a multi-tile channel layout"
    Hout = H + 2 * padding - (K - 1)
    Wout = W + 2 * padding - (K - 1)
    assert (Hout, Wout) == (H, W), "FractalAttention uses a 'same' 3x3 convolution"

    HW = H * W
    M = N * HW
    KKC = K * K * Cin
    f32 = jnp.float32

    # Packed channel layout: branch i lives at lanes [i*cstride, i*cstride + Cout).
    if 3 * Cout <= _LANES:
        cstride, cw = Cout, _LANES          # single 128-lane slab (the common / fast case)
    else:
        cstride, cw = _LANES, 3 * _LANES    # fallback: 3 x 128-lane blocks

    # Row tile: multiple of 8 dividing H*W (tiles never cross image boundaries).
    if row_tile is None:
        row_tile, cand = 8, 8
        while cand <= min(HW, 1024):
            if HW % cand == 0:
                row_tile = cand
            cand += 8
    assert row_tile % 8 == 0 and HW % row_tile == 0, (
        "TODO(synk): pad H*W (with in-kernel row masking of the reductions) for spatial "
        "sizes whose H*W has no multiple-of-8 divisor")
    tiles_per_image = HW // row_tile
    n_tiles = N * tiles_per_image

    # ----- wrapper glue: im2col + packed weight / BN layouts -------------------
    x_nhwc = jnp.transpose(x_nchw, (0, 2, 3, 1)).astype(f32)
    x_pad = jnp.pad(x_nhwc, ((0, 0), (padding, padding), (padding, padding), (0, 0)))
    patches = [x_pad[:, kh:kh + H, kw:kw + W, :] for kh in range(K) for kw in range(K)]
    xcol = jnp.concatenate(patches, axis=-1).reshape(M, KKC)        # (M, K*K*Cin)

    def to_col(w):  # (Cout, Cin, K, K) -> (K*K*Cin, Cout), tap-major / channel-minor
        return jnp.transpose(w.astype(f32), (2, 3, 1, 0)).reshape(KKC, Cout)

    w_cat = jnp.zeros((KKC, cw), f32)
    gamma_cat = jnp.zeros((1, cw), f32)
    # Padding lanes get beta = -30 so (gamma=0, shift=-30) => sigmoid ~ 0 there: no cmask input.
    beta_cat = jnp.full((1, cw), -30.0, f32)
    for i, (w, g, b) in enumerate(((wq, gq, bq), (wk, gk, bk), (wv, gv, bv))):
        lo = i * cstride
        w_cat = w_cat.at[:, lo:lo + Cout].set(to_col(w))
        gamma_cat = gamma_cat.at[:, lo:lo + Cout].set(g.astype(f32))
        beta_cat = beta_cat.at[:, lo:lo + Cout].set(b.astype(f32))

    # ----- BlockSpecs -----------------------------------------------------------
    row_spec = pl.BlockSpec((row_tile, cw), lambda n, t: (n * tiles_per_image + t, 0))
    xcol_spec = pl.BlockSpec((row_tile, KKC), lambda n, t: (n * tiles_per_image + t, 0))
    w_spec = pl.BlockSpec((KKC, cw), lambda n, t: (0, 0))          # resident weight
    vec_spec = pl.BlockSpec((1, cw), lambda n, t: (0, 0))          # resident (1, CW) vectors
    mom_spec = pl.BlockSpec((1, 1, cw), lambda n, t: (n, 0, 0))    # per-image accumulators
    csum_spec = pl.BlockSpec((1, 4, cw), lambda n, t: (n, 0, 0))
    attch_spec = pl.BlockSpec((1, cw), lambda n, t: (n, 0))
    row_spec_1d = pl.BlockSpec((row_tile, cw), lambda t: (t, 0))
    vec_spec_1d = pl.BlockSpec((1, cw), lambda t: (0, 0))

    # Leading batch axis "parallel" (v7x megacore shards it); the inner row-tile axis carries
    # the per-image reductions so it stays "arbitrary".
    reduce_params = pltpu.CompilerParams(
        dimension_semantics=("parallel", "arbitrary"), vmem_limit_bytes=_VMEM_LIMIT)
    map_params = pltpu.CompilerParams(
        dimension_semantics=("parallel",), vmem_limit_bytes=_VMEM_LIMIT)

    # ----- Pass A: conv (im2col matmul) + per-image conv-BN moments -------------
    yconv, cmean, cm2 = pl.pallas_call(
        functools.partial(_conv_stats_kernel, row_tile=row_tile),
        grid=(N, tiles_per_image),
        in_specs=[xcol_spec, w_spec],
        out_specs=(row_spec, mom_spec, mom_spec),
        out_shape=(jax.ShapeDtypeStruct((M, cw), f32),
                   jax.ShapeDtypeStruct((N, 1, cw), f32),
                   jax.ShapeDtypeStruct((N, 1, cw), f32)),
        compiler_params=reduce_params,
    )(xcol, w_cat)

    # Fold conv-BN (batch statistics, biased variance) into a per-channel scale/shift.
    cmean_t, cm2_t = _merge_group_moments(cmean, cm2, HW)
    cvar = cm2_t / M
    cinv = lax.rsqrt(cvar + eps)
    scale = gamma_cat * cinv
    shift = beta_cat - cmean_t * scale       # padded lanes: 0*y - 30 -> sigmoid ~ 0

    # ----- Pass B: per-image channel-similarity sums -----------------------------
    csum = pl.pallas_call(
        functools.partial(_qkv_channel_sim_kernel,
                          out_channels=Cout, branch_stride=cstride),
        grid=(N, tiles_per_image),
        in_specs=[row_spec, vec_spec, vec_spec],
        out_specs=csum_spec,
        out_shape=jax.ShapeDtypeStruct((N, 4, cw), f32),
        compiler_params=reduce_params,
    )(yconv, scale, shift)

    # Tiny O(N*C) channel-attention math (wrapper glue).
    s_qk, s_q2k2, s_q, s_k = csum[:, 0], csum[:, 1], csum[:, 2], csum[:, 3]
    score = (s_qk + smooth) / (s_q2k2 - s_qk + smooth)
    tpl_c = HW - s_q - s_k + s_qk
    sq_c = 2.0 * HW - 2.0 * s_q - 2.0 * s_k + s_q2k2
    score_c = (tpl_c + smooth) / (sq_c - tpl_c + smooth)
    att_ch = 0.5 * (score + score_c)                               # (N, CW)

    # ----- Pass C: attention rows (written) + per-image final-BN moments ---------
    att_slab, fmean, fm2 = pl.pallas_call(
        functools.partial(_attention_stats_kernel, row_tile=row_tile,
                          out_channels=Cout, branch_stride=cstride, smooth=smooth),
        grid=(N, tiles_per_image),
        in_specs=[row_spec, vec_spec, vec_spec, attch_spec],
        out_specs=(row_spec, mom_spec, mom_spec),
        out_shape=(jax.ShapeDtypeStruct((M, cw), f32),
                   jax.ShapeDtypeStruct((N, 1, cw), f32),
                   jax.ShapeDtypeStruct((N, 1, cw), f32)),
        compiler_params=reduce_params,
    )(yconv, scale, shift, att_ch)

    fmean_t, fm2_t = _merge_group_moments(fmean, fm2, HW)
    fvar = fm2_t / M
    finv = lax.rsqrt(fvar + eps)
    g2p = jnp.zeros((1, cw), f32).at[:, :Cout].set(g2.astype(f32))
    b2p = jnp.zeros((1, cw), f32).at[:, :Cout].set(b2.astype(f32))
    fscale = g2p * finv
    fshift = b2p - fmean_t * fscale

    # ----- Pass D: trivial normalization map over the attention slab -------------
    out_slab = pl.pallas_call(
        _final_norm_kernel,
        grid=(n_tiles,),
        in_specs=[row_spec_1d, vec_spec_1d, vec_spec_1d],
        out_specs=row_spec_1d,
        out_shape=jax.ShapeDtypeStruct((M, cw), f32),
        compiler_params=map_params,
    )(att_slab, fscale, fshift)

    out = out_slab.reshape(N, H, W, cw)[..., :Cout]
    return jnp.transpose(out, (0, 3, 1, 2)).astype(x_nchw.dtype)


# ---------------------------------------------------------------------------
# Pure-JAX reference (mirrors the PyTorch forward in training mode).
# ---------------------------------------------------------------------------
def _reference(x, params, *, eps=1e-5, smooth=1e-5):
    def conv_bn_sig(x, w, g, b):
        y = lax.conv_general_dilated(
            x, w, window_strides=(1, 1), padding=[(1, 1), (1, 1)],
            dimension_numbers=("NCHW", "OIHW", "NCHW"))
        mu = jnp.mean(y, axis=(0, 2, 3), keepdims=True)
        var = jnp.mean((y - mu) ** 2, axis=(0, 2, 3), keepdims=True)
        yn = (y - mu) * lax.rsqrt(var + eps) * g.reshape(1, -1, 1, 1) + b.reshape(1, -1, 1, 1)
        return 1.0 / (1.0 + jnp.exp(-yn))

    q = conv_bn_sig(x, *params["query"])
    k = conv_bn_sig(x, *params["key"])
    v = conv_bn_sig(x, *params["value"])

    def tanimoto(a, b, dims):
        tpl = jnp.sum(a * b, axis=dims, keepdims=True)
        sq = jnp.sum(a * a + b * b, axis=dims, keepdims=True)
        return (tpl + smooth) / (sq - tpl + smooth)

    att_sp = 0.5 * (tanimoto(q, k, (1,)) + tanimoto(1.0 - q, 1.0 - k, (1,)))
    att_ch = 0.5 * (tanimoto(q, k, (2, 3)) + tanimoto(1.0 - q, 1.0 - k, (2, 3)))
    att = 0.5 * (att_sp * v + att_ch * v)

    g2, b2 = params["norm"]
    mu = jnp.mean(att, axis=(0, 2, 3), keepdims=True)
    var = jnp.mean((att - mu) ** 2, axis=(0, 2, 3), keepdims=True)
    return (att - mu) * lax.rsqrt(var + eps) * g2.reshape(1, -1, 1, 1) + b2.reshape(1, -1, 1, 1)


if __name__ == "__main__":
    # FractalAttention(in_channels=4, out_channels=8) on x of shape (2, 4, 16, 16).
    N, Cin, H, W = 2, 4, 16, 16
    Cout, K = 8, 3

    key = jax.random.PRNGKey(0)
    keys = jax.random.split(key, 10)
    x = jax.random.normal(keys[0], (N, Cin, H, W), dtype=jnp.float32)

    fan_in = Cin * K * K
    bound = (1.0 / fan_in) ** 0.5

    def conv_w(kk):
        return jax.random.uniform(kk, (Cout, Cin, K, K),
                                  minval=-bound, maxval=bound, dtype=jnp.float32)

    def bn_params(kg, kb):
        return (1.0 + 0.1 * jax.random.normal(kg, (Cout,), jnp.float32),
                0.1 * jax.random.normal(kb, (Cout,), jnp.float32))

    params = {
        "query": (conv_w(keys[1]), *bn_params(keys[4], keys[5])),
        "key":   (conv_w(keys[2]), *bn_params(keys[6], keys[7])),
        "value": (conv_w(keys[3]), *bn_params(keys[8], keys[9])),
        "norm":  (jnp.ones((Cout,), jnp.float32), jnp.zeros((Cout,), jnp.float32)),
    }

    out = fractal_attention(x, params, row_tile=128)   # grid (2 images, 2 tiles/image)
    out = jax.block_until_ready(out)

    ref = _reference(x, params)
    assert out.shape == (N, Cout, H, W)
    err = float(jnp.max(jnp.abs(out - ref)))
    assert jnp.allclose(out, ref, atol=1e-3, rtol=1e-3), f"max abs err = {err}"

    print("KERNEL_OK")
</pallas_src>

<mosaic_0001>
module attributes {stable_mosaic.version = 11 : i64} {
  func.func @_conv_stats_kernel(%arg0: i32, %arg1: i32, %arg2: memref<128x36xf32, #tpu.memory_space<vmem>>, %arg3: memref<36x128xf32, #tpu.memory_space<vmem>>, %arg4: memref<128x128xf32, #tpu.memory_space<vmem>>, %arg5: memref<1x1x128xf32, #tpu.memory_space<vmem>>, %arg6: memref<1x1x128xf32, #tpu.memory_space<vmem>>) attributes {dimension_semantics = [#tpu.dimension_semantics<parallel>, #tpu.dimension_semantics<arbitrary>], iteration_bounds = array<i64: 2, 2>, scalar_prefetch = 0 : i64, scratch_operands = 0 : i64, tpu.core_type = #tpu.core_type<tc>, window_params = [{transform_indices = @transform_0, window_bounds = array<i64: 128, 36>}, {pipeline_mode = #tpu.pipeline_mode<synchronous>, transform_indices = @transform_1, window_bounds = array<i64: 36, 128>}, {transform_indices = @transform_2, window_bounds = array<i64: 128, 128>}, {transform_indices = @transform_3, window_bounds = array<i64: 1, 1, 128>}, {transform_indices = @transform_4, window_bounds = array<i64: 1, 1, 128>}]} {
    %c0_i32 = arith.constant 0 : i32
    %0 = arith.cmpi eq, %arg1, %c0_i32 : i32
    %1 = arith.extui %0 : i1 to i32
    %c0_i32_0 = arith.constant 0 : i32
    %2 = arith.cmpi ne, %1, %c0_i32_0 : i32
    scf.if %2 {
      %cst_27 = arith.constant 0.000000e+00 : f32
      %38 = vector.broadcast %cst_27 : f32 to vector<1x1x128xf32>
      %c0_28 = arith.constant 0 : index
      %c0_29 = arith.constant 0 : index
      %c0_30 = arith.constant 0 : index
      %39 = vector.load %arg5[%c0_28, %c0_29, %c0_30] : memref<1x1x128xf32, #tpu.memory_space<vmem>>, vector<1x1x128xf32>
      tpu.vector_store %arg5[%c0_28, %c0_29, %c0_30], %38 {strides = array<i32>} : memref<1x1x128xf32, #tpu.memory_space<vmem>>, vector<1x1x128xf32>,
      %cst_31 = arith.constant 0.000000e+00 : f32
      %40 = vector.broadcast %cst_31 : f32 to vector<1x1x128xf32>
      %c0_32 = arith.constant 0 : index
      %c0_33 = arith.constant 0 : index
      %c0_34 = arith.constant 0 : index
      %41 = vector.load %arg6[%c0_32, %c0_33, %c0_34] : memref<1x1x128xf32, #tpu.memory_space<vmem>>, vector<1x1x128xf32>
      tpu.vector_store %arg6[%c0_32, %c0_33, %c0_34], %40 {strides = array<i32>} : memref<1x1x128xf32, #tpu.memory_space<vmem>>, vector<1x1x128xf32>,
    } else {
    }
    %c0 = arith.constant 0 : index
    %c0_1 = arith.constant 0 : index
    %3 = vector.load %arg2[%c0, %c0_1] : memref<128x36xf32, #tpu.memory_space<vmem>>, vector<128x36xf32>
    %c0_2 = arith.constant 0 : index
    %c0_3 = arith.constant 0 : index
    %4 = vector.load %arg3[%c0_2, %c0_3] : memref<36x128xf32, #tpu.memory_space<vmem>>, vector<36x128xf32>
    %cst = arith.constant dense<0.000000e+00> : vector<128x128xf32>
    %5 = tpu.matmul %3, %4, %cst {dimension_numbers = #tpu.dot_dimension_numbers<[1], [0], [0], [1], [0, 0, 1, 1], [], []>} : vector<128x36xf32>, vector<36x128xf32>, vector<128x128xf32> -> vector<128x128xf32>
    %c0_4 = arith.constant 0 : index
    %c0_5 = arith.constant 0 : index
    %6 = vector.load %arg4[%c0_4, %c0_5] : memref<128x128xf32, #tpu.memory_space<vmem>>, vector<128x128xf32>
    tpu.vector_store %arg4[%c0_4, %c0_5], %5 {strides = array<i32>} : memref<128x128xf32, #tpu.memory_space<vmem>>, vector<128x128xf32>,
    %c128_i32 = arith.constant 128 : i32
    %7 = arith.muli %arg1, %c128_i32 : i32
    %8 = arith.sitofp %7 : i32 to f32
    %cst_6 = arith.constant 1.280000e+02 : f32
    %9 = arith.addf %8, %cst_6 : f32
    %cst_7 = arith.constant dense<0.000000e+00> : vector<128xf32>
    %10 = vector.multi_reduction <add>, %5, %cst_7 [0] : vector<128x128xf32> to vector<128xf32>
    %11 = vector.shape_cast %10 : vector<128xf32> to vector<1x128xf32>
    %cst_8 = arith.constant 1.280000e+02 : f32
    %12 = vector.broadcast %cst_8 : f32 to vector<1x128xf32>
    %13 = arith.divf %11, %12 : vector<1x128xf32>
    %14 = vector.broadcast %13 : vector<1x128xf32> to vector<128x128xf32>
    %15 = arith.subf %5, %14 : vector<128x128xf32>
    %16 = arith.mulf %15, %15 : vector<128x128xf32>
    %cst_9 = arith.constant dense<0.000000e+00> : vector<128xf32>
    %17 = vector.multi_reduction <add>, %16, %cst_9 [0] : vector<128x128xf32> to vector<128xf32>
    %18 = vector.shape_cast %17 : vector<128xf32> to vector<1x128xf32>
    %19 = vector.shape_cast %13 : vector<1x128xf32> to vector<1x1x128xf32>
    %20 = vector.shape_cast %18 : vector<1x128xf32> to vector<1x1x128xf32>
    %c0_10 = arith.constant 0 : index
    %c0_11 = arith.constant 0 : index
    %c0_12 = arith.constant 0 : index
    %21 = vector.load %arg5[%c0_10, %c0_11, %c0_12] : memref<1x1x128xf32, #tpu.memory_space<vmem>>, vector<1x1x128xf32>
    %22 = arith.subf %19, %21 : vector<1x1x128xf32>
    %c0_13 = arith.constant 0 : index
    %c0_14 = arith.constant 0 : index
    %c0_15 = arith.constant 0 : index
    %23 = vector.load %arg5[%c0_13, %c0_14, %c0_15] : memref<1x1x128xf32, #tpu.memory_space<vmem>>, vector<1x1x128xf32>
    %cst_16 = arith.constant 1.280000e+02 : f32
    %24 = arith.divf %cst_16, %9 : f32
    %25 = vector.broadcast %24 : f32 to vector<1x1x128xf32>
    %26 = arith.mulf %22, %25 : vector<1x1x128xf32>
    %27 = arith.addf %23, %26 : vector<1x1x128xf32>
    %c0_17 = arith.constant 0 : index
    %c0_18 = arith.constant 0 : index
    %c0_19 = arith.constant 0 : index
    %28 = vector.load %arg5[%c0_17, %c0_18, %c0_19] : memref<1x1x128xf32, #tpu.memory_space<vmem>>, vector<1x1x128xf32>
    tpu.vector_store %arg5[%c0_17, %c0_18, %c0_19], %27 {strides = array<i32>} : memref<1x1x128xf32, #tpu.memory_space<vmem>>, vector<1x1x128xf32>,
    %c0_20 = arith.constant 0 : index
    %c0_21 = arith.constant 0 : index
    %c0_22 = arith.constant 0 : index
    %29 = vector.load %arg6[%c0_20, %c0_21, %c0_22] : memref<1x1x128xf32, #tpu.memory_space<vmem>>, vector<1x1x128xf32>
    %30 = arith.mulf %22, %22 : vector<1x1x128xf32>
    %cst_23 = arith.constant 1.280000e+02 : f32
    %31 = arith.mulf %8, %cst_23 : f32
    %32 = arith.divf %31, %9 : f32
    %33 = vector.broadcast %32 : f32 to vector<1x1x128xf32>
    %34 = arith.mulf %30, %33 : vector<1x1x128xf32>
    %35 = arith.addf %20, %34 : vector<1x1x128xf32>
    %36 = arith.addf %29, %35 : vector<1x1x128xf32>
    %c0_24 = arith.constant 0 : index
    %c0_25 = arith.constant 0 : index
    %c0_26 = arith.constant 0 : index
    %37 = vector.load %arg6[%c0_24, %c0_25, %c0_26] : memref<1x1x128xf32, #tpu.memory_space<vmem>>, vector<1x1x128xf32>
    tpu.vector_store %arg6[%c0_24, %c0_25, %c0_26], %36 {strides = array<i32>} : memref<1x1x128xf32, #tpu.memory_space<vmem>>, vector<1x1x128xf32>,
    return
  }
  func.func @transform_0(%arg0: i32, %arg1: i32) -> (i32, i32) {
    %c2_i32 = arith.constant 2 : i32
    %0 = arith.muli %arg0, %c2_i32 : i32
    %1 = arith.addi %0, %arg1 : i32
    %c0_i32 = arith.constant 0 : i32
    %c0_i32_0 = arith.constant 0 : i32
    return %1, %c0_i32 : i32, i32
  }
  func.func @transform_1(%arg0: i32, %arg1: i32) -> (i32, i32) {
    %c0_i32 = arith.constant 0 : i32
    %c0_i32_0 = arith.constant 0 : i32
    %c0_i32_1 = arith.constant 0 : i32
    return %c0_i32, %c0_i32_0 : i32, i32
  }
  func.func @transform_2(%arg0: i32, %arg1: i32) -> (i32, i32) {
    %c2_i32 = arith.constant 2 : i32
    %0 = arith.muli %arg0, %c2_i32 : i32
    %1 = arith.addi %0, %arg1 : i32
    %c0_i32 = arith.constant 0 : i32
    %c0_i32_0 = arith.constant 0 : i32
    return %1, %c0_i32 : i32, i32
  }
  func.func @transform_3(%arg0: i32, %arg1: i32) -> (i32, i32, i32) {
    %c0_i32 = arith.constant 0 : i32
    %c0_i32_0 = arith.constant 0 : i32
    %c0_i32_1 = arith.constant 0 : i32
    return %arg0, %c0_i32, %c0_i32_0 : i32, i32, i32
  }
  func.func @transform_4(%arg0: i32, %arg1: i32) -> (i32, i32, i32) {
    %c0_i32 = arith.constant 0 : i32
    %c0_i32_0 = arith.constant 0 : i32
    %c0_i32_1 = arith.constant 0 : i32
    return %arg0, %c0_i32, %c0_i32_0 : i32, i32, i32
  }
}

</mosaic_0001>

<llo_original>
// kernel: tpu_custom_call.1
$region0: #{tpu_custom_call.1}
  #allocation0 [shape = 'u32[]', space=smem, size = 0x4, offset = 0x4, fixed_abs, tag = 'smem constant byte address 0x4 - core index']
  #allocation1 [shape = 'u32[144,128]{1,0:T(1,128)}', space=vmem, size = 0x12000, scoped, tag = 'internal scratch']
  %s0 = inlined_call_operand.vmem [shape: f32[512,36], index: 0, kind: input, shape index: {}]
  %s1 = inlined_call_operand.vmem [shape: f32[36,128], index: 1, kind: input, shape index: {}]
  %s2 = inlined_call_operand.hbm [shape: f32[512,128], index: 2, kind: output, shape index: {0}]
  %s3 = inlined_call_operand.hbm [shape: f32[2,1,128], index: 3, kind: output, shape index: {1}]
  %s4 = inlined_call_operand.hbm [shape: f32[2,1,128], index: 4, kind: output, shape index: {2}]
  %5 = xla_tuple %s2, %s3, %s4
  %s6 = sld [smem:[#allocation0]]
  $region61: #{tpu_custom_call.1} parent=0
    _
  %s8 = ssub.s32 1, %s6
  %s9 = scalar_select 0, %s8, %s6
  $region1: #{tpu_custom_call.1} parent=0
    #allocation2 [shape = 'u8[131072]{0}', space=vmem, size = 0x20000, scoped, tag = 'output window, operand 0']
    #allocation3 [shape = 's32[2]{0}', space=sflag, size = 0x8, scoped, tag = 'scoped memory for tpu_custom_call.1']
    #allocation4 [shape = 'u8[1024]{0}', space=vmem, size = 0x400, scoped, tag = 'output window, operand 1']
    #allocation5 [shape = 's32[2]{0}', space=sflag, size = 0x8, scoped, tag = 'scoped memory for tpu_custom_call.1']
    #allocation6 [shape = 'u8[1024]{0}', space=vmem, size = 0x400, scoped, tag = 'output window, operand 2']
    %10 = vsyncpa [#allocation3], 0
    %s11 = scalar_lea.sflag [#allocation3], 1
    %12 = vsyncpa %s11, 0
    %13 = vsyncpa [#allocation5], 0
    %s14 = scalar_lea.sflag [#allocation5], 1
    %15 = vsyncpa %s14, 0
    loop: start=0, step=1, limit=6
    $region2: #{tpu_custom_call.1} parent=1 // loop_pre_header
      _
    $region3: #{tpu_custom_call.1} parent=1 // loop_header
      %s17 = sphi 0, %s21
      %p18 = scmp.ge.s32.totalorder %s17, 6
      %s24 = sphi 0, %s36
      %s25 = sphi 0, %s32
      %s26 = sphi 0, %s24
      %s27 = sphi 0, %s25
      %s28 = sphi 0, %s26
      %s29 = sphi 0, %s27
      %s43 = sphi 0, %s45
      %s46 = sphi 0, %s43
      %s47 = sphi 0, %s46
      %s63 = sphi 0, %s47
      %s67 = sphi 0, %s67
      %s69 = sphi 0, %s67
      %s70 = sphi 0, %s69
      %s84 = sphi 0, %s70
      %s94 = sphi 0, %s96
      %s97 = sphi 0, %s94
      %s98 = sphi 0, %s97
      %s114 = sphi 0, %s98
      %s120 = sphi 0, %s122
      %s123 = sphi 0, %s120
      %s124 = sphi 0, %s123
      %s140 = sphi 0, %s124
      %s146 = sphi 0, %s148
      %s149 = sphi 0, %s146
      %s150 = sphi 0, %s149
      %s166 = sphi 0, %s150
    $region4: #{tpu_custom_call.1} parent=1 // loop_header_branch
      %20 = sbr.rel (%p18) target = $region8
    $region5: #{tpu_custom_call.1} parent=1 // loop_body
      %s22 = ssub.s32 %s17, 1
      %s23 = ssub.s32 %s17, 2
      %s30 = sadd.s32 1, %s25
      %p31 = scmp.ge.s32.totalorder %s30, 2
      %s32 = scalar_select %p31, 0, %s30
      %s33 = sadd.s32 1, %s24
      %s34 = scalar_select %p31, %s33, %s24
      %p35 = scmp.ge.s32.totalorder %s34, 2
      %s36 = scalar_select %p35, 0, %s34
      %s37 = smul.u32 %s24, 2
      %s38 = sadd.s32 %s37, %s25
      %s39 = smul.u32 %s36, 2
      %s40 = sadd.s32 %s39, %s32
      %s41 = ssub.s32 %s38, %s40
      %p42 = scmp.eq.s32.totalorder %s41, 0
      %s44 = sadd.s32 %s43, 1
      %s45 = scalar_select %p42, %s43, %s44
      %p48 = pneg %p42
      %p49 = scmp.eq.s32.totalorder %s17, 3
      %p50 = por %p48, %p49
      %p51 = scmp.ne.s32.totalorder %s43, %s46
      %p52 = scmp.eq.s32.totalorder %s17, 0
      %p53 = por %p51, %p52
      %p54 = scmp.ne.s32.totalorder %s43, %s46
      %p55 = scmp.eq.s32.totalorder %s22, 3
      %p56 = por %p54, %p55
      %p57 = scmp.ne.s32.totalorder %s46, %s47
      %p58 = scmp.eq.s32.totalorder %s22, 0
      %p59 = por %p57, %p58
      %p60 = scmp.ne.s32.totalorder %s46, %s47
      %p61 = scmp.eq.s32.totalorder %s23, 3
      %p62 = por %p60, %p61
      %p64 = scmp.ne.s32.totalorder %s47, %s63
      %p65 = scmp.eq.s32.totalorder %s23, 0
      %p66 = por %p64, %p65
      %s68 = sadd.s32 %s67, 1
      %p71 = scmp.eq.s32.totalorder %s17, 3
      %p72 = scmp.ne.s32.totalorder %s67, %s69
      %p73 = scmp.eq.s32.totalorder %s17, 0
      %p74 = por %p72, %p73
      %p75 = scmp.ne.s32.totalorder %s67, %s69
      %p76 = scmp.eq.s32.totalorder %s22, 3
      %p77 = por %p75, %p76
      %p78 = scmp.ne.s32.totalorder %s69, %s70
      %p79 = scmp.eq.s32.totalorder %s22, 0
      %p80 = por %p78, %p79
      %p81 = scmp.ne.s32.totalorder %s69, %s70
      %p82 = scmp.eq.s32.totalorder %s23, 3
      %p83 = por %p81, %p82
      %p85 = scmp.ne.s32.totalorder %s70, %s84
      %p86 = scmp.eq.s32.totalorder %s23, 0
      %p87 = por %p85, %p86
      %s88 = smul.u32 %s24, 2
      %s89 = sadd.s32 %s88, %s25
      %s90 = smul.u32 %s36, 2
      %s91 = sadd.s32 %s90, %s32
      %s92 = ssub.s32 %s89, %s91
      %p93 = scmp.eq.s32.totalorder %s92, 0
      %s95 = sadd.s32 %s94, 1
      %s96 = scalar_select %p93, %s94, %s95
      %p99 = pneg %p93
      %p100 = scmp.eq.s32.totalorder %s17, 3
      %p101 = por %p99, %p100
      %p102 = scmp.ne.s32.totalorder %s94, %s97
      %p103 = scmp.eq.s32.totalorder %s17, 0
      %p104 = por %p102, %p103
      %p105 = scmp.ne.s32.totalorder %s94, %s97
      %p106 = scmp.eq.s32.totalorder %s22, 3
      %p107 = por %p105, %p106
      %p108 = scmp.ne.s32.totalorder %s97, %s98
      %p109 = scmp.eq.s32.totalorder %s22, 0
      %p110 = por %p108, %p109
      %p111 = scmp.ne.s32.totalorder %s97, %s98
      %p112 = scmp.eq.s32.totalorder %s23, 3
      %p113 = por %p111, %p112
      %p115 = scmp.ne.s32.totalorder %s98, %s114
      %p116 = scmp.eq.s32.totalorder %s23, 0
      %p117 = por %p115, %p116
      %s118 = ssub.s32 %s24, %s36
      %p119 = scmp.eq.s32.totalorder %s118, 0
      %s121 = sadd.s32 %s120, 1
      %s122 = scalar_select %p119, %s120, %s121
      %p125 = pneg %p119
      %p126 = scmp.eq.s32.totalorder %s17, 3
      %p127 = por %p125, %p126
      %p128 = scmp.ne.s32.totalorder %s120, %s123
      %p129 = scmp.eq.s32.totalorder %s17, 0
      %p130 = por %p128, %p129
      %p131 = scmp.ne.s32.totalorder %s120, %s123
      %p132 = scmp.eq.s32.totalorder %s22, 3
      %p133 = por %p131, %p132
      %p134 = scmp.ne.s32.totalorder %s123, %s124
      %p135 = scmp.eq.s32.totalorder %s22, 0
      %p136 = por %p134, %p135
      %p137 = scmp.ne.s32.totalorder %s123, %s124
      %p138 = scmp.eq.s32.totalorder %s23, 3
      %p139 = por %p137, %p138
      %p141 = scmp.ne.s32.totalorder %s124, %s140
      %p142 = scmp.eq.s32.totalorder %s23, 0
      %p143 = por %p141, %p142
      %s144 = ssub.s32 %s24, %s36
      %p145 = scmp.eq.s32.totalorder %s144, 0
      %s147 = sadd.s32 %s146, 1
      %s148 = scalar_select %p145, %s146, %s147
      %p151 = pneg %p145
      %p152 = scmp.eq.s32.totalorder %s17, 3
      %p153 = por %p151, %p152
      %p154 = scmp.ne.s32.totalorder %s146, %s149
      %p155 = scmp.eq.s32.totalorder %s17, 0
      %p156 = por %p154, %p155
      %p157 = scmp.ne.s32.totalorder %s146, %s149
      %p158 = scmp.eq.s32.totalorder %s22, 3
      %p159 = por %p157, %p158
      %p160 = scmp.ne.s32.totalorder %s149, %s150
      %p161 = scmp.eq.s32.totalorder %s22, 0
      %p162 = por %p160, %p161
      %p163 = scmp.ne.s32.totalorder %s149, %s150
      %p164 = scmp.eq.s32.totalorder %s23, 3
      %p165 = por %p163, %p164
      %p167 = scmp.ne.s32.totalorder %s150, %s166
      %p168 = scmp.eq.s32.totalorder %s23, 0
      %p169 = por %p167, %p168
      %p170 = scmp.le.s32.totalorder 1, %s17
      %p171 = scmp.lt.s32.totalorder %s17, 5
      %p172 = pnand %p170, %p171
      %p173 = pneg %p172
      // Predicated region
      $region9: #{tpu_custom_call.1} parent=5 // pred_check
        _
      $region10: #{tpu_custom_call.1} parent=5 // pred_check_branch
        %175 = sbr.rel (%p172) target = $region12
      $region11: #{tpu_custom_call.1} parent=5 // pred_region
        %s176 = ssub.s32 %s17, 1
        // Predicated region
        $region13: #{tpu_custom_call.1} parent=11 // pred_check
          %p177 = pneg %p80
        $region14: #{tpu_custom_call.1} parent=11 // pred_check_branch
          %179 = sbr.rel (%p177) target = $region16
        $region15: #{tpu_custom_call.1} parent=11 // pred_region
          _
        $region16: #{tpu_custom_call.1} parent=11 // pred_fallthru
          _
      $region12: #{tpu_custom_call.1} parent=5 // pred_fallthru
        _
      %p180 = scmp.lt.s32.totalorder %s17, 4
      // Predicated region
      $region17: #{tpu_custom_call.1} parent=5 // pred_check
        %p181 = pneg %p180
      $region18: #{tpu_custom_call.1} parent=5 // pred_check_branch
        %183 = sbr.rel (%p181) target = $region20
      $region19: #{tpu_custom_call.1} parent=5 // pred_region
        // Predicated region
        $region21: #{tpu_custom_call.1} parent=19 // pred_check
          %p184 = pneg %p53
        $region22: #{tpu_custom_call.1} parent=19 // pred_check_branch
          %186 = sbr.rel (%p184) target = $region24
        $region23: #{tpu_custom_call.1} parent=19 // pred_region
          %s187 = smul.u32 %s24, 2
          %s188 = sadd.s32 %s187, %s25
          %s189 = smul.u32 16, %s188
          %p190 = scmp.lt.s32.totalorder %s189, 63
          %s191 = scalar_select %p190, %s189, 63
          %s192 = smul.addr %s191, 8
          %s193 = scalar_lea.vmem %s0, %s192
          %s194 = smul.u32 %s24, 2
          %s195 = sadd.s32 %s194, %s25
          %s196 = smul.u32 16, %s195
        $region24: #{tpu_custom_call.1} parent=19 // pred_fallthru
          _
      $region20: #{tpu_custom_call.1} parent=5 // pred_fallthru
        _
      %p197 = scmp.le.s32.totalorder 1, %s17
      %p198 = scmp.lt.s32.totalorder %s17, 5
      %p199 = pnand %p197, %p198
      %p200 = pneg %p199
      // Predicated region
      $region25: #{tpu_custom_call.1} parent=5 // pred_check
        _
      $region26: #{tpu_custom_call.1} parent=5 // pred_check_branch
        %202 = sbr.rel (%p199) target = $region28
      $region27: #{tpu_custom_call.1} parent=5 // pred_region
        %s203 = ssub.s32 %s17, 1
        %s204 = smul.u32 %s26, 2
        %s205 = sadd.s32 %s204, %s27
        %s206 = smul.u32 16, %s205
        %p207 = scmp.lt.s32.totalorder %s206, 63
        %s208 = scalar_select %p207, %s206, 63
        %s209 = smul.addr %s208, 8
        %s210 = scalar_lea.vmem %s0, %s209
        %p211 = pneg %p59
        %p212 = pneg %p56
        %p213 = pneg %p80
        %p214 = pneg %p77
        %p215 = pneg %p110
        %p216 = pneg %p107
        %s217 = sand.u32 %s97, 1
        %s218 = scalar_lea.sflag [#allocation3], %s217
        %s219 = sand.u32 %s97, 1
        %s220 = smul.addr %s219, 128
        %s221 = scalar_lea.vmem [#allocation2], %s220
        %p222 = pneg %p136
        %p223 = pneg %p133
        %s224 = sand.u32 %s22, 1
        %s225 = scalar_lea.sflag [#allocation5], %s224
        %s226 = sand.u32 %s123, 1
        %s227 = scalar_lea.vmem [#allocation4], %s226
        %p228 = pneg %p162
        %p229 = pneg %p159
        %s230 = sand.u32 %s22, 1
        %s231 = scalar_lea.sflag [#allocation5], %s230
        %s232 = sand.u32 %s149, 1
        %s233 = scalar_lea.vmem [#allocation6], %s232
        %s234 = smul.u32 %s26, 2
        %s235 = sadd.s32 %s234, %s27
        %s236 = smul.u32 16, %s235
        %p237 = scmp.lt.s32.totalorder %s236, 63
        %s238 = scalar_select %p237, %s236, 63
        %s239 = smul.addr %s238, 8
        %s240 = scalar_lea.vmem %s0, %s239
        %s241 = smul.u32 %s26, 2
        %s242 = sadd.s32 %s241, %s27
        %s243 = smul.u32 16, %s242
        %s244 = smul.u32 %s26, 2
        %s245 = sadd.s32 %s244, %s27
        %s246 = smul.u32 16, %s245
        %p247 = scmp.eq.s32.totalorder %s27, 0
        // Predicated region
        $region29: #{tpu_custom_call.1} parent=27 // pred_check
          %p248 = pneg %p247
        $region30: #{tpu_custom_call.1} parent=27 // pred_check_branch
          %250 = sbr.rel (%p248) target = $region32
        $region31: #{tpu_custom_call.1} parent=27 // pred_region
          %251 = vst [vmem:[%s227] sm:$0x1] 0.0
          %252 = vst [vmem:[%s233] sm:$0x1] 0.0
        $region32: #{tpu_custom_call.1} parent=27 // pred_fallthru
          _
        %v253 = vld [vmem:[%s240] sm:$0xff]
        %v254 = vld [vmem:[%s240 + $0x8] sm:$0xff]
        %v255 = vld [vmem:[%s240 + $0x10] sm:$0xff]
        %v256 = vld [vmem:[%s240 + $0x18] sm:$0xff]
        %v257 = vld [vmem:[%s240 + $0x20] sm:$0xff]
        %v258 = vld [vmem:[%s240 + $0x28] sm:$0xff]
        %v259 = vld [vmem:[%s240 + $0x30] sm:$0xff]
        %v260 = vld [vmem:[%s240 + $0x38] sm:$0xff]
        %v261 = vld [vmem:[%s240 + $0x40] sm:$0xff]
        %v262 = vld [vmem:[%s240 + $0x48] sm:$0xff]
        %v263 = vld [vmem:[%s240 + $0x50] sm:$0xff]
        %v264 = vld [vmem:[%s240 + $0x58] sm:$0xff]
        %v265 = vld [vmem:[%s240 + $0x60] sm:$0xff]
        %v266 = vld [vmem:[%s240 + $0x68] sm:$0xff]
        %v267 = vld [vmem:[%s240 + $0x70] sm:$0xff]
        %v268 = vld [vmem:[%s240 + $0x78] sm:$0xff]
        %v269 = vld [vmem:[%s1] sm:$0xff]
        %v270 = vld [vmem:[%s1 + $0x8] sm:$0xff]
        %v271 = vld [vmem:[%s1 + $0x10] sm:$0xff]
        %v272 = vld [vmem:[%s1 + $0x18] sm:$0xff]
        %v273 = vld [vmem:[%s1 + $0x20] sm:$0xf]
        %vm274 = vcmask 293888
        %v276 = vsel %vm274, %v253, 0
        %v279 = vsel %vm274, %v254, 0
        %v282 = vsel %vm274, %v255, 0
        %v285 = vsel %vm274, %v256, 0
        %v288 = vsel %vm274, %v257, 0
        %v291 = vsel %vm274, %v258, 0
        %v294 = vsel %vm274, %v259, 0
        %v297 = vsel %vm274, %v260, 0
        %v300 = vsel %vm274, %v261, 0
        %v303 = vsel %vm274, %v262, 0
        %v306 = vsel %vm274, %v263, 0
        %v309 = vsel %vm274, %v264, 0
        %v312 = vsel %vm274, %v265, 0
        %v315 = vsel %vm274, %v266, 0
        %v318 = vsel %vm274, %v267, 0
        %v321 = vsel %vm274, %v268, 0
        %vm323 = vcmask 1043456
        %v325 = vsel %vm323, %v273, 0
        %327 = vmatprep.subr.mxu0 0.0
        %328 = vmatpush1.msra.mxu0 %v269
        %329 = vmatprep.subr.mxu0 0.0
        %330 = vmatpush1.msra.mxu0 %v270
        %331 = vmatprep.subr.mxu0 0.0
        %332 = vmatpush1.msra.mxu0 %v271
        %333 = vmatprep.subr.mxu0 0.0
        %334 = vmatpush1.msra.mxu0 %v272
        %335 = vmatprep.subr.mxu0 0.0
        %336 = vmatpush1.msra.mxu0 %v325
        %337 = vmatprep.subr.mxu0 0.0
        %338 = vmatpush1.msra.mxu0 0.0
        %339 = vmatprep.subr.mxu0 0.0
        %340 = vmatpush1.msra.mxu0 0.0
        %341 = vmatprep.subr.mxu0 0.0
        %342 = vmatpush1.msra.mxu0 0.0
        %343 = vmatprep.subr.mxu0 0.0
        %344 = vmatpush1.msra.mxu0 0.0
        %345 = vmatprep.subr.mxu0 0.0
        %346 = vmatpush1.msra.mxu0 0.0
        %347 = vmatprep.subr.mxu0 0.0
        %348 = vmatpush1.msra.mxu0 0.0
        %349 = vmatprep.subr.mxu0 0.0
        %350 = vmatpush1.msra.mxu0 0.0
        %351 = vmatprep.subr.mxu0 0.0
        %352 = vmatpush1.msra.mxu0 0.0
        %353 = vmatprep.subr.mxu0 0.0
        %354 = vmatpush1.msra.mxu0 0.0
        %355 = vmatprep.subr.mxu0 0.0
        %356 = vmatpush1.msra.mxu0 0.0
        %357 = vmatprep.subr.mxu0 0.0
        %358 = vmatpush1.msra.mxu0 0.0
        %359 = vmatprep.subr.mxu0 0.0
        %360 = vmatpush1.msra.mxu0 0.0
        %361 = vmatprep.subr.mxu0 0.0
        %362 = vmatpush1.msra.mxu0 0.0
        %363 = vmatprep.subr.mxu0 0.0
        %364 = vmatpush1.msra.mxu0 0.0
        %365 = vmatprep.subr.mxu0 0.0
        %366 = vmatpush1.msra.mxu0 0.0
        %367 = vmatprep.subr.mxu0 0.0
        %368 = vmatpush1.msra.mxu0 0.0
        %369 = vmatprep.subr.mxu0 0.0
        %370 = vmatpush1.msra.mxu0 0.0
        %371 = vmatprep.subr.mxu0 0.0
        %372 = vmatpush1.msra.mxu0 0.0
        %373 = vmatprep.subr.mxu0 0.0
        %374 = vmatpush1.msra.mxu0 0.0
        %375 = vmatprep.subr.mxu0 0.0
        %376 = vmatpush1.msra.mxu0 0.0
        %377 = vmatprep.subr.mxu0 0.0
        %378 = vmatpush1.msra.mxu0 0.0
        %379 = vmatprep.subr.mxu0 0.0
        %380 = vmatpush1.msra.mxu0 0.0
        %381 = vmatprep.subr.mxu0 0.0
        %382 = vmatpush1.msra.mxu0 0.0
        %383 = vmatprep.subr.mxu0 0.0
        %384 = vmatpush1.msra.mxu0 0.0
        %385 = vmatprep.subr.mxu0 0.0
        %386 = vmatpush1.msra.mxu0 0.0
        %387 = vmatprep.subr.mxu0 0.0
        %388 = vmatpush1.msra.mxu0 0.0
        %389 = vmatprep.subr.mxu0 0.0
        %390 = vmatpush1.msra.mxu0 0.0
        %391 = vmatprep.mubr.f32.mxu0 0.0
        %392 = vmatmul.mubr.f32.gmra.mrb[0].mxu0 %v276
        %v393 = vpop.f32.mrb[0].mxu0
        %v394 = vadd.f32 0.0, %v393
        %v395 = vpop.f32.mrb[0].mxu0
        %396 = vmatprep.mubr.f32.mxu0 0.0
        %397 = vmatmul.mubr.f32.gmra.mrb[0].mxu0 %v279
        %v398 = vpop.f32.mrb[0].mxu0
        %v399 = vadd.f32 0.0, %v398
        %v400 = vpop.f32.mrb[0].mxu0
        %401 = vmatprep.mubr.f32.mxu0 0.0
        %402 = vmatmul.mubr.f32.gmra.mrb[0].mxu0 %v282
        %v403 = vpop.f32.mrb[0].mxu0
        %v404 = vadd.f32 0.0, %v403
        %v405 = vpop.f32.mrb[0].mxu0
        %406 = vmatprep.mubr.f32.mxu0 0.0
        %407 = vmatmul.mubr.f32.gmra.mrb[0].mxu0 %v285
        %v408 = vpop.f32.mrb[0].mxu0
        %v409 = vadd.f32 0.0, %v408
        %v410 = vpop.f32.mrb[0].mxu0
        %411 = vmatprep.mubr.f32.mxu0 0.0
        %412 = vmatmul.mubr.f32.gmra.mrb[0].mxu0 %v288
        %v413 = vpop.f32.mrb[0].mxu0
        %v414 = vadd.f32 0.0, %v413
        %v415 = vpop.f32.mrb[0].mxu0
        %416 = vmatprep.mubr.f32.mxu0 0.0
        %417 = vmatmul.mubr.f32.gmra.mrb[0].mxu0 %v291
        %v418 = vpop.f32.mrb[0].mxu0
        %v419 = vadd.f32 0.0, %v418
        %v420 = vpop.f32.mrb[0].mxu0
        %421 = vmatprep.mubr.f32.mxu0 0.0
        %422 = vmatmul.mubr.f32.gmra.mrb[0].mxu0 %v294
        %v423 = vpop.f32.mrb[0].mxu0
        %v424 = vadd.f32 0.0, %v423
        %v425 = vpop.f32.mrb[0].mxu0
        %426 = vmatprep.mubr.f32.mxu0 0.0
        %427 = vmatmul.mubr.f32.gmra.mrb[0].mxu0 %v297
        %v428 = vpop.f32.mrb[0].mxu0
        %v429 = vadd.f32 0.0, %v428
        %v430 = vpop.f32.mrb[0].mxu0
        %431 = vmatprep.mubr.f32.mxu0 0.0
        %432 = vmatmul.mubr.f32.gmra.mrb[0].mxu0 %v300
        %v433 = vpop.f32.mrb[0].mxu0
        %v434 = vadd.f32 0.0, %v433
        %v435 = vpop.f32.mrb[0].mxu0
        %436 = vmatprep.mubr.f32.mxu0 0.0
        %437 = vmatmul.mubr.f32.gmra.mrb[0].mxu0 %v303
        %v438 = vpop.f32.mrb[0].mxu0
        %v439 = vadd.f32 0.0, %v438
        %v440 = vpop.f32.mrb[0].mxu0
        %441 = vmatprep.mubr.f32.mxu0 0.0
        %442 = vmatmul.mubr.f32.gmra.mrb[0].mxu0 %v306
        %v443 = vpop.f32.mrb[0].mxu0
        %v444 = vadd.f32 0.0, %v443
        %v445 = vpop.f32.mrb[0].mxu0
        %446 = vmatprep.mubr.f32.mxu0 0.0
        %447 = vmatmul.mubr.f32.gmra.mrb[0].mxu0 %v309
        %v448 = vpop.f32.mrb[0].mxu0
        %v449 = vadd.f32 0.0, %v448
        %v450 = vpop.f32.mrb[0].mxu0
        %451 = vmatprep.mubr.f32.mxu0 0.0
        %452 = vmatmul.mubr.f32.gmra.mrb[0].mxu0 %v312
        %v453 = vpop.f32.mrb[0].mxu0
        %v454 = vadd.f32 0.0, %v453
        %v455 = vpop.f32.mrb[0].mxu0
        %456 = vmatprep.mubr.f32.mxu0 0.0
        %457 = vmatmul.mubr.f32.gmra.mrb[0].mxu0 %v315
        %v458 = vpop.f32.mrb[0].mxu0
        %v459 = vadd.f32 0.0, %v458
        %v460 = vpop.f32.mrb[0].mxu0
        %461 = vmatprep.mubr.f32.mxu0 0.0
        %462 = vmatmul.mubr.f32.gmra.mrb[0].mxu0 %v318
        %v463 = vpop.f32.mrb[0].mxu0
        %v464 = vadd.f32 0.0, %v463
        %v465 = vpop.f32.mrb[0].mxu0
        %466 = vmatprep.mubr.f32.mxu0 0.0
        %467 = vmatmul.mubr.f32.gmra.mrb[0].mxu0 %v321
        %v468 = vpop.f32.mrb[0].mxu0
        %v469 = vadd.f32 0.0, %v468
        %v470 = vpop.f32.mrb[0].mxu0
        %471 = vdwg.mxu0
        %472 = vst [vmem:[%s221] sm:$0xff] %v394
        %473 = vst [vmem:[%s221 + $0x8] sm:$0xff] %v399
        %474 = vst [vmem:[%s221 + $0x10] sm:$0xff] %v404
        %475 = vst [vmem:[%s221 + $0x18] sm:$0xff] %v409
        %476 = vst [vmem:[%s221 + $0x20] sm:$0xff] %v414
        %477 = vst [vmem:[%s221 + $0x28] sm:$0xff] %v419
        %478 = vst [vmem:[%s221 + $0x30] sm:$0xff] %v424
        %479 = vst [vmem:[%s221 + $0x38] sm:$0xff] %v429
        %480 = vst [vmem:[%s221 + $0x40] sm:$0xff] %v434
        %481 = vst [vmem:[%s221 + $0x48] sm:$0xff] %v439
        %482 = vst [vmem:[%s221 + $0x50] sm:$0xff] %v444
        %483 = vst [vmem:[%s221 + $0x58] sm:$0xff] %v449
        %484 = vst [vmem:[%s221 + $0x60] sm:$0xff] %v454
        %485 = vst [vmem:[%s221 + $0x68] sm:$0xff] %v459
        %486 = vst [vmem:[%s221 + $0x70] sm:$0xff] %v464
        %487 = vst [vmem:[%s221 + $0x78] sm:$0xff] %v469
        %s488 = smul.u32 %s27, 128
        %s489 = scvt.s32.f32 %s488
        %s490 = sadd.f32 %s489, 128.0
        %v491 = vadd.f32 %v394, %v399
        %v492 = vadd.f32 %v491, %v404
        %v493 = vadd.f32 %v492, %v409
        %v494 = vadd.f32 %v493, %v414
        %v495 = vadd.f32 %v494, %v419
        %v496 = vadd.f32 %v495, %v424
        %v497 = vadd.f32 %v496, %v429
        %v498 = vadd.f32 %v497, %v434
        %v499 = vadd.f32 %v498, %v439
        %v500 = vadd.f32 %v499, %v444
        %v501 = vadd.f32 %v500, %v449
        %v502 = vadd.f32 %v501, %v454
        %v503 = vadd.f32 %v502, %v459
        %v504 = vadd.f32 %v503, %v464
        %v505 = vadd.f32 %v504, %v469
        %v506 = vrot.slane %v505, 4
        %v507 = vadd.f32 %v505, %v506
        %v508 = vrot.slane %v507, 2
        %v509 = vadd.f32 %v507, %v508
        %v510 = vrot.slane %v509, 1
        %v511 = vadd.f32 %v509, %v510
        %v512 = vrcp.pop 128.0
        %v513 = vmul.f32 %v511, %v512
        %v514 = vsub.f32 %v394, %v513
        %v515 = vsub.f32 %v399, %v513
        %v516 = vsub.f32 %v404, %v513
        %v517 = vsub.f32 %v409, %v513
        %v518 = vsub.f32 %v414, %v513
        %v519 = vsub.f32 %v419, %v513
        %v520 = vsub.f32 %v424, %v513
        %v521 = vsub.f32 %v429, %v513
        %v522 = vsub.f32 %v434, %v513
        %v523 = vsub.f32 %v439, %v513
        %v524 = vsub.f32 %v444, %v513
        %v525 = vsub.f32 %v449, %v513
        %v526 = vsub.f32 %v454, %v513
        %v527 = vsub.f32 %v459, %v513
        %v528 = vsub.f32 %v464, %v513
        %v529 = vsub.f32 %v469, %v513
        %v530 = vmul.f32 %v514, %v514
        %v531 = vmul.f32 %v515, %v515
        %v532 = vmul.f32 %v516, %v516
        %v533 = vmul.f32 %v517, %v517
        %v534 = vmul.f32 %v518, %v518
        %v535 = vmul.f32 %v519, %v519
        %v536 = vmul.f32 %v520, %v520
        %v537 = vmul.f32 %v521, %v521
        %v538 = vmul.f32 %v522, %v522
        %v539 = vmul.f32 %v523, %v523
        %v540 = vmul.f32 %v524, %v524
        %v541 = vmul.f32 %v525, %v525
        %v542 = vmul.f32 %v526, %v526
        %v543 = vmul.f32 %v527, %v527
        %v544 = vmul.f32 %v528, %v528
        %v545 = vmul.f32 %v529, %v529
        %v546 = vadd.f32 %v530, %v531
        %v547 = vadd.f32 %v546, %v532
        %v548 = vadd.f32 %v547, %v533
        %v549 = vadd.f32 %v548, %v534
        %v550 = vadd.f32 %v549, %v535
        %v551 = vadd.f32 %v550, %v536
        %v552 = vadd.f32 %v551, %v537
        %v553 = vadd.f32 %v552, %v538
        %v554 = vadd.f32 %v553, %v539
        %v555 = vadd.f32 %v554, %v540
        %v556 = vadd.f32 %v555, %v541
        %v557 = vadd.f32 %v556, %v542
        %v558 = vadd.f32 %v557, %v543
        %v559 = vadd.f32 %v558, %v544
        %v560 = vadd.f32 %v559, %v545
        %v561 = vrot.slane %v560, 4
        %v562 = vadd.f32 %v560, %v561
        %v563 = vrot.slane %v562, 2
        %v564 = vadd.f32 %v562, %v563
        %v565 = vrot.slane %v564, 1
        %v566 = vadd.f32 %v564, %v565
        %v567 = vld [vmem:[%s227] sm:$0x1]
        %v568 = vsub.f32 %v513, %v567
        %v569 = vstv %s490
        %v570 = vrcp.pop %v569
        %s571 = vtos %v570
        %s572 = smul.f32 128.0, %s571
        %v573 = vstv %s572
        %v574 = vmul.f32 %v568, %v573
        %v575 = vadd.f32 %v567, %v574
        %576 = vst [vmem:[%s227] sm:$0x1] %v575
        %v577 = vld [vmem:[%s233] sm:$0x1]
        %v578 = vmul.f32 %v568, %v568
        %s579 = smul.f32 %s489, 128.0
        %v580 = vstv %s490
        %v581 = vrcp.pop %v580
        %s582 = vtos %v581
        %s583 = smul.f32 %s579, %s582
        %v584 = vstv %s583
        %v585 = vmul.f32 %v578, %v584
        %v586 = vadd.f32 %v566, %v585
        %v587 = vadd.f32 %v577, %v586
        %588 = vst [vmem:[%s233] sm:$0x1] %v587
        %s589 = sand.u32 %s97, 1
        %s590 = scalar_lea.sflag [#allocation3], %s589
        %s591 = sand.u32 %s97, 1
        %s592 = smul.addr %s591, 128
        %s593 = scalar_lea.vmem [#allocation2], %s592
        %s594 = sand.u32 %s22, 1
        %s595 = scalar_lea.sflag [#allocation5], %s594
        %s596 = sand.u32 %s123, 1
        %s597 = scalar_lea.vmem [#allocation4], %s596
        %s598 = sand.u32 %s22, 1
        %s599 = scalar_lea.sflag [#allocation5], %s598
        %s600 = sand.u32 %s149, 1
        %s601 = scalar_lea.vmem [#allocation6], %s600
        // Predicated region
        $region33: #{tpu_custom_call.1} parent=27 // pred_check
          %p602 = pneg %p107
        $region34: #{tpu_custom_call.1} parent=27 // pred_check_branch
          %604 = sbr.rel (%p602) target = $region36
        $region35: #{tpu_custom_call.1} parent=27 // pred_region
          %s605 = smul.u32 %s26, 2
          %s606 = sadd.s32 %s605, %s27
          %s607 = smul.u32 16, %s606
          %s609 = ssub.s32 2048, 2048
          %610 = vsyncadd %s590, %s609
          %s611 = smul.addr %s607, 128
          %s612 = scalar_lea.hbm %s2, %s611
          %s613 = sshll.u32 %s593, 4
          %s614 = int_to_ptr.vmem [resolvable:$true] %s613
          %619 = dma.vmem_to_hbm [thread:$0]  %s614, 2048, %s612, %s590, 128, 128, 8
        $region36: #{tpu_custom_call.1} parent=27 // pred_fallthru
          _
        // Predicated region
        $region37: #{tpu_custom_call.1} parent=27 // pred_check
          %p620 = pneg %p133
        $region38: #{tpu_custom_call.1} parent=27 // pred_check_branch
          %622 = sbr.rel (%p620) target = $region40
        $region39: #{tpu_custom_call.1} parent=27 // pred_region
          %s624 = ssub.s32 16, 16
          %625 = vsyncadd %s595, %s624
          %s626 = smul.addr %s26, 16
          %s627 = scalar_lea.hbm %s3, %s626
          %s629 = sshll.u32 %s597, 4
          %s630 = int_to_ptr.vmem [resolvable:$true] %s629
          %632 = dma.vmem_to_hbm [thread:$0]  %s630, 16, %s627, %s595
        $region40: #{tpu_custom_call.1} parent=27 // pred_fallthru
          _
        // Predicated region
        $region41: #{tpu_custom_call.1} parent=27 // pred_check
          %p633 = pneg %p159
        $region42: #{tpu_custom_call.1} parent=27 // pred_check_branch
          %635 = sbr.rel (%p633) target = $region44
        $region43: #{tpu_custom_call.1} parent=27 // pred_region
          %s637 = ssub.s32 16, 16
          %638 = vsyncadd %s599, %s637
          %s639 = smul.addr %s26, 16
          %s640 = scalar_lea.hbm %s4, %s639
          %s642 = sshll.u32 %s601, 4
          %s643 = int_to_ptr.vmem [resolvable:$true] %s642
          %645 = dma.vmem_to_hbm [thread:$0]  %s643, 16, %s640, %s599
        $region44: #{tpu_custom_call.1} parent=27 // pred_fallthru
          _
      $region28: #{tpu_custom_call.1} parent=5 // pred_fallthru
        _
      %p646 = scmp.le.s32.totalorder 2, %s17
      // Predicated region
      $region45: #{tpu_custom_call.1} parent=5 // pred_check
        %p647 = pneg %p646
      $region46: #{tpu_custom_call.1} parent=5 // pred_check_branch
        %649 = sbr.rel (%p647) target = $region48
      $region47: #{tpu_custom_call.1} parent=5 // pred_region
        %s650 = ssub.s32 %s17, 2
        // Predicated region
        $region49: #{tpu_custom_call.1} parent=47 // pred_check
          %p651 = pneg %p113
        $region50: #{tpu_custom_call.1} parent=47 // pred_check_branch
          %653 = sbr.rel (%p651) target = $region52
        $region51: #{tpu_custom_call.1} parent=47 // pred_region
          %s654 = sand.u32 %s98, 1
          %s655 = scalar_lea.sflag [#allocation3], %s654
          %s656 = sand.u32 %s98, 1
          %s657 = smul.addr %s656, 128
          %s658 = scalar_lea.vmem [#allocation2], %s657
          %659 = dma.done %s655, 2048
        $region52: #{tpu_custom_call.1} parent=47 // pred_fallthru
          _
        // Predicated region
        $region53: #{tpu_custom_call.1} parent=47 // pred_check
          %p660 = pneg %p139
        $region54: #{tpu_custom_call.1} parent=47 // pred_check_branch
          %662 = sbr.rel (%p660) target = $region56
        $region55: #{tpu_custom_call.1} parent=47 // pred_region
          %s663 = sand.u32 %s23, 1
          %s664 = scalar_lea.sflag [#allocation5], %s663
          %s665 = sand.u32 %s124, 1
          %s666 = scalar_lea.vmem [#allocation4], %s665
          %667 = dma.done %s664, 16
        $region56: #{tpu_custom_call.1} parent=47 // pred_fallthru
          _
        // Predicated region
        $region57: #{tpu_custom_call.1} parent=47 // pred_check
          %p668 = pneg %p165
        $region58: #{tpu_custom_call.1} parent=47 // pred_check_branch
          %670 = sbr.rel (%p668) target = $region60
        $region59: #{tpu_custom_call.1} parent=47 // pred_region
          %s671 = sand.u32 %s23, 1
          %s672 = scalar_lea.sflag [#allocation5], %s671
          %s673 = sand.u32 %s150, 1
          %s674 = scalar_lea.vmem [#allocation6], %s673
          %675 = dma.done %s672, 16
        $region60: #{tpu_custom_call.1} parent=47 // pred_fallthru
          _
      $region48: #{tpu_custom_call.1} parent=5 // pred_fallthru
        _
    $region6: #{tpu_custom_call.1} parent=1 // loop_footer
      %s21 = sadd.s32 1, %s17
    $region7: #{tpu_custom_call.1} parent=1 // loop_footer_branch
      %16 = sbr.rel target = $region3
    $region8: #{tpu_custom_call.1} parent=1 // loop_exit
      _
    %676 = vsyncpa [#allocation3], 1
    %s677 = scalar_lea.sflag [#allocation3], 1
    %678 = vsyncpa %s677, 1
    %679 = vsyncpa [#allocation5], 1
    %s680 = scalar_lea.sflag [#allocation5], 1
    %681 = vsyncpa %s680, 1

</llo_original>
